<compile_context>
chip_gen: v7x
topology: tpu7x:2x2x1
jax: 0.10.0
libtpu: 0.0.40
codegen_flags: <defaults>
</compile_context>

<pallas_src>
import math
import functools

import jax
import jax.numpy as jnp
from jax import lax
from jax.experimental import pallas as pl
from jax.experimental.pallas import tpu as pltpu


# ----------------------------------------------------------------------------
# Parameter / buffer setup (plain JAX, mirrors the registered buffer in __init__)
# ----------------------------------------------------------------------------
def make_positional_encoding(max_len: int, d_model: int, dtype=jnp.float32):
    position = jnp.arange(0, max_len, dtype=jnp.float32)[:, None]            # (L, 1)
    div_term = jnp.exp(
        jnp.arange(0, d_model, 2, dtype=jnp.float32)
        * -(math.log(10000.0) / d_model)
    )                                                                         # (D/2,)
    pe = jnp.zeros((max_len, d_model), dtype=jnp.float32)
    pe = pe.at[:, 0::2].set(jnp.sin(position * div_term))
    pe = pe.at[:, 1::2].set(jnp.cos(position * div_term))
    return pe.astype(dtype)                                                   # (L, D)


# ----------------------------------------------------------------------------
# Kernels
# ----------------------------------------------------------------------------
def _pe_add_kernel(x_ref, pe_ref, o_ref):
    # Eval mode: broadcasted PE add (pe_ref is either (TS, D) or (1, TL)).
    o_ref[...] = (x_ref[...] + pe_ref[...]).astype(o_ref.dtype)


def _hash_u32(x):
    # lowbias32 integer hash: good avalanche on sequential inputs, VPU-only ops
    # (xor / logical shift / wrapping mul), lowers on TPU and in interpret mode.
    x = x ^ (x >> 16)
    x = x * jnp.uint32(0x7FEB352D)
    x = x ^ (x >> 15)
    x = x * jnp.uint32(0x846CA68B)
    x = x ^ (x >> 16)
    return x


def _pe_add_dropout_kernel(seed_ref, x_ref, pe_ref, o_ref, *,
                           threshold, scale, grid_ndim):
    # Training mode: PE add + inverted dropout, mask generated in-kernel from a
    # counter-based hash PRNG (no extra HBM traffic, no TPU-only primitives).
    y = x_ref[...] + pe_ref[...]
    rows, cols = y.shape

    # Globally unique tile id (flattened grid index) -> per-tile seed.
    tid = pl.program_id(0)
    if grid_ndim == 2:
        tid = tid * pl.num_programs(1) + pl.program_id(1)
    block_seed = _hash_u32(
        tid.astype(jnp.uint32) * jnp.uint32(0x9E3779B9)
        + seed_ref[0].astype(jnp.uint32)
    )

    # Per-element counter within the tile.
    r = lax.broadcasted_iota(jnp.int32, (rows, cols), 0)
    c = lax.broadcasted_iota(jnp.int32, (rows, cols), 1)
    local_idx = (r * cols + c).astype(jnp.uint32)

    u = _hash_u32(local_idx + block_seed)            # ~uniform uint32 bits
    keep = u >= jnp.uint32(threshold)                # integer-threshold compare
    kept = y * jnp.asarray(scale, dtype=y.dtype)
    o_ref[...] = jnp.where(keep, kept, jnp.zeros_like(kept)).astype(o_ref.dtype)


# ----------------------------------------------------------------------------
# Tile-size selection (~2 MiB blocks: fits scoped-VMEM defaults on v5e/v6e/v7x
# with double-buffered x + out + pe, and stays near the HBM-roofline sweet spot)
# ----------------------------------------------------------------------------
_TARGET_BLOCK_BYTES = 2 * 1024 * 1024


def _row_tile(S, D, itemsize, target_bytes=_TARGET_BLOCK_BYTES, row_cap=1024):
    limit = min(row_cap, max(8, target_bytes // max(1, D * itemsize)))
    if S <= limit:
        return S
    t = (limit // 8) * 8
    while t >= 8:
        if S % t == 0:
            return t
        t -= 8
    return S  # fallback: whole sequence per block (always layout-legal)


def _lane_tile(B, C, itemsize, target_bytes=_TARGET_BLOCK_BYTES):
    if C % 128 != 0:
        return C  # only the full-extent block is layout-legal
    limit = max(128, target_bytes // max(1, B * itemsize))
    if C <= limit:
        return C
    t = (limit // 128) * 128
    while t >= 128:
        if C % t == 0:
            return t
        t -= 128
    return C


# ----------------------------------------------------------------------------
# Wrapper (forward pass of the PyTorch module)
# ----------------------------------------------------------------------------
def positional_encoder(x, pe_table, *, dropout_p=0.1, training=False, seed=0):
    """x: (B, S, D); pe_table: (max_len, D)."""
    B, S, D = x.shape
    max_len, d_model = pe_table.shape
    assert d_model == D and S <= max_len

    pe = pe_table.astype(x.dtype)          # pre-cast once (halves PE DMA for bf16 x)
    itemsize = jnp.dtype(x.dtype).itemsize

    use_dropout = training and dropout_p > 0.0
    if use_dropout and dropout_p >= 1.0:
        return jnp.zeros_like(x)           # torch.nn.Dropout(p=1) drops everything

    if D % 128 == 0 and S % 8 == 0:
        # Lane-dense main path: rows = B*S, lanes = D (multiple of 128).
        TS = _row_tile(S, D, itemsize)
        n_s = S // TS
        x2 = x.reshape(B * S, D)
        pe_arr = pe                         # full table; BlockSpec picks the window
        grid = (n_s, B)                     # batch innermost -> PE block stays resident
        x_spec = pl.BlockSpec((TS, D), lambda s, b, *_: (b * n_s + s, 0))
        pe_spec = pl.BlockSpec((TS, D), lambda s, b, *_: (s, 0))
        out_spec = pl.BlockSpec((TS, D), lambda s, b, *_: (b * n_s + s, 0))
    else:
        # Small / odd D (e.g. demo D=32): flatten (S, D) into one lane axis so the
        # output last dim is a large multiple of 128 (unmasked stores).
        C = S * D
        TL = _lane_tile(B, C, itemsize)
        x2 = x.reshape(B, C)
        pe_arr = pe[:S].reshape(1, C)
        grid = (C // TL,)
        x_spec = pl.BlockSpec((B, TL), lambda l, *_: (0, l))
        pe_spec = pl.BlockSpec((1, TL), lambda l, *_: (0, l))
        out_spec = pl.BlockSpec((B, TL), lambda l, *_: (0, l))

    out_shape = jax.ShapeDtypeStruct(x2.shape, x.dtype)
    cparams = pltpu.CompilerParams(dimension_semantics=("parallel",) * len(grid))

    if not use_dropout:
        grid_spec = pltpu.PrefetchScalarGridSpec(
            num_scalar_prefetch=0, grid=grid,
            in_specs=[x_spec, pe_spec], out_specs=out_spec)
        out2 = pl.pallas_call(
            _pe_add_kernel, out_shape=out_shape,
            grid_spec=grid_spec, compiler_params=cparams,
        )(x2, pe_arr)
    else:
        threshold = min(int(round(dropout_p * (1 << 32))), (1 << 32) - 1)
        scale = 1.0 / (1.0 - dropout_p)
        kernel = functools.partial(
            _pe_add_dropout_kernel,
            threshold=threshold, scale=scale, grid_ndim=len(grid))
        seed_arr = jnp.asarray([seed], dtype=jnp.int32)
        grid_spec = pltpu.PrefetchScalarGridSpec(
            num_scalar_prefetch=1, grid=grid,
            in_specs=[x_spec, pe_spec], out_specs=out_spec)
        out2 = pl.pallas_call(
            kernel, out_shape=out_shape,
            grid_spec=grid_spec, compiler_params=cparams,
        )(seed_arr, x2, pe_arr)

    return out2.reshape(B, S, D)


# ----------------------------------------------------------------------------
# Demo / self-check
# ----------------------------------------------------------------------------
if __name__ == "__main__":
    B, S, D = 2, 8, 32
    MAX_LEN = 2000
    DROPOUT_P = 0.1

    key = jax.random.PRNGKey(0)
    x = jax.random.normal(key, (B, S, D), dtype=jnp.float32)
    pe_table = make_positional_encoding(MAX_LEN, D)

    # Eval mode (dropout = identity): must match x + pe.
    y_eval = jax.block_until_ready(
        positional_encoder(x, pe_table, dropout_p=DROPOUT_P, training=False))
    ref = x + pe_table[None, :S, :]
    assert y_eval.shape == x.shape and y_eval.dtype == x.dtype
    assert jnp.allclose(y_eval, ref, atol=1e-6), "eval-mode mismatch"

    # Training mode (stochastic inverted dropout, mask generated in-kernel).
    y_train = jax.block_until_ready(
        positional_encoder(x, pe_table, dropout_p=DROPOUT_P, training=True, seed=1234))
    scaled = ref / (1.0 - DROPOUT_P)
    # every surviving element equals ref/(1-p); dropped elements are exactly 0
    ok = jnp.all(jnp.isclose(y_train, scaled, atol=1e-5) | (y_train == 0.0))
    assert bool(ok), "train-mode dropout semantics violated"

    print("KERNEL_OK")
</pallas_src>

<mosaic_0001>
module attributes {stable_mosaic.version = 11 : i64} {
  func.func @_pe_add_kernel(%arg0: i32, %arg1: memref<2x256xf32, #tpu.memory_space<vmem>>, %arg2: memref<1x256xf32, #tpu.memory_space<vmem>>, %arg3: memref<2x256xf32, #tpu.memory_space<vmem>>) attributes {dimension_semantics = [#tpu.dimension_semantics<parallel>], iteration_bounds = array<i64: 1>, scalar_prefetch = 0 : i64, scratch_operands = 0 : i64, tpu.core_type = #tpu.core_type<tc>, window_params = [{transform_indices = @transform_0, window_bounds = array<i64: 2, 256>}, {transform_indices = @transform_1, window_bounds = array<i64: 1, 256>}, {transform_indices = @transform_2, window_bounds = array<i64: 2, 256>}]} {
    %c0 = arith.constant 0 : index
    %c0_0 = arith.constant 0 : index
    %0 = vector.load %arg1[%c0, %c0_0] : memref<2x256xf32, #tpu.memory_space<vmem>>, vector<2x256xf32>
    %c0_1 = arith.constant 0 : index
    %c0_2 = arith.constant 0 : index
    %1 = vector.load %arg2[%c0_1, %c0_2] : memref<1x256xf32, #tpu.memory_space<vmem>>, vector<1x256xf32>
    %2 = vector.broadcast %1 : vector<1x256xf32> to vector<2x256xf32>
    %3 = arith.addf %0, %2 : vector<2x256xf32>
    %c0_3 = arith.constant 0 : index
    %c0_4 = arith.constant 0 : index
    %4 = vector.load %arg3[%c0_3, %c0_4] : memref<2x256xf32, #tpu.memory_space<vmem>>, vector<2x256xf32>
    tpu.vector_store %arg3[%c0_3, %c0_4], %3 {strides = array<i32>} : memref<2x256xf32, #tpu.memory_space<vmem>>, vector<2x256xf32>,
    return
  }
  func.func @transform_0(%arg0: i32) -> (i32, i32) {
    %c0_i32 = arith.constant 0 : i32
    %c0_i32_0 = arith.constant 0 : i32
    return %c0_i32, %arg0 : i32, i32
  }
  func.func @transform_1(%arg0: i32) -> (i32, i32) {
    %c0_i32 = arith.constant 0 : i32
    %c0_i32_0 = arith.constant 0 : i32
    return %c0_i32, %arg0 : i32, i32
  }
  func.func @transform_2(%arg0: i32) -> (i32, i32) {
    %c0_i32 = arith.constant 0 : i32
    %c0_i32_0 = arith.constant 0 : i32
    return %c0_i32, %arg0 : i32, i32
  }
}

</mosaic_0001>

<llo_original>
// kernel: tpu_custom_call.1
$region0: #{tpu_custom_call.1}
  #allocation0 [shape = 'u32[]', space=smem, size = 0x4, offset = 0x4, fixed_abs, tag = 'smem constant byte address 0x4 - core index']
  #allocation1 [shape = 'u32[144,128]{1,0:T(1,128)}', space=vmem, size = 0x12000, scoped, tag = 'internal scratch']
  %s0 = inlined_call_operand.hbm [shape: f32[2,256], index: 0, kind: input, shape index: {}]
  %s1 = inlined_call_operand.vmem [shape: f32[1,256], index: 1, kind: input, shape index: {}]
  %s2 = inlined_call_operand.hbm [shape: f32[2,256], index: 2, kind: output, shape index: {}]
  %s3 = sld [smem:[#allocation0]]
  $region22: #{tpu_custom_call.1} parent=0
    _
  %s5 = ssub.s32 1, %s3
  %s6 = scalar_select 0, %s5, %s3
  $region1: #{tpu_custom_call.1} parent=0
    #allocation2 [shape = 'u8[2048]{0}', space=vmem, size = 0x800, scoped, tag = 'input window, operand 0, single buffered']
    #allocation3 [shape = 's32[1]{0}', space=sflag, size = 0x4, scoped, tag = 'scoped memory for tpu_custom_call.1']
    #allocation4 [shape = 's32[1]{0}', space=sflag, size = 0x4, scoped, tag = 'scoped memory for tpu_custom_call.1']
    #allocation5 [shape = 'u8[2048]{0}', space=vmem, size = 0x800, scoped, tag = 'output window, operand 0, single buffered']
    %7 = vsyncpa [#allocation3], 0
    %8 = vsyncpa [#allocation4], 0
    // Predicated region
    $region2: #{tpu_custom_call.1} parent=1 // pred_check
      _
    $region3: #{tpu_custom_call.1} parent=1 // pred_check_branch
      %10 = sbr.rel (0) target = $region5
    $region4: #{tpu_custom_call.1} parent=1 // pred_region
      %s12 = ssub.s32 64, 64
      %13 = vsyncadd [#allocation3], %s12
      %s15 = sshll.u32 [#allocation2], 4
      %s16 = int_to_ptr.vmem [resolvable:$true] %s15
      %18 = dma.hbm_to_vmem [thread:$0]  %s0, 64, %s16, [#allocation3]
    $region5: #{tpu_custom_call.1} parent=1 // pred_fallthru
      _
    // Predicated region
    $region6: #{tpu_custom_call.1} parent=1 // pred_check
      _
    $region7: #{tpu_custom_call.1} parent=1 // pred_check_branch
      %20 = sbr.rel (0) target = $region9
    $region8: #{tpu_custom_call.1} parent=1 // pred_region
      _
    $region9: #{tpu_custom_call.1} parent=1 // pred_fallthru
      _
    // Predicated region
    $region10: #{tpu_custom_call.1} parent=1 // pred_check
      _
    $region11: #{tpu_custom_call.1} parent=1 // pred_check_branch
      %22 = sbr.rel (0) target = $region13
    $region12: #{tpu_custom_call.1} parent=1 // pred_region
      %23 = dma.done [#allocation3], 64
    $region13: #{tpu_custom_call.1} parent=1 // pred_fallthru
      _
    %v24 = vld [vmem:[#allocation2] sm:$0xf]
    %v25 = vld [vmem:[%s1] sm:$0x3]
    %v27 = vlaneseq
    %v28 = vshrl.u32 %v27, 7
    %v29 = vsub.s32 0, %v28
    %v30 = vrot.slane %v25, %v29
    %v31 = vlaneseq
    %v32 = vshrl.u32 %v31, 7
    %v33 = vsub.s32 1, %v32
    %v34 = vrot.slane %v25, %v33
    %v35 = vcombine.low %v30, %v34
    %v37 = vunpack.c.l.s4 1983009808
    %v38 = vunpack.c.0.s8 %v37
    %v39 = vlaneseq
    %v40 = vshrl.u32 %v39, 7
    %v41 = vsub.s32 %v38, %v40
    %v42 = vrot.slane %v35, %v41
    %v44 = vadd.f32 %v24, %v42
    %45 = vst [vmem:[#allocation5] sm:$0xf] %v44
    // Predicated region
    $region14: #{tpu_custom_call.1} parent=1 // pred_check
      _
    $region15: #{tpu_custom_call.1} parent=1 // pred_check_branch
      %47 = sbr.rel (0) target = $region17
    $region16: #{tpu_custom_call.1} parent=1 // pred_region
      %s49 = ssub.s32 64, 64
      %50 = vsyncadd [#allocation4], %s49
      %s52 = sshll.u32 [#allocation5], 4
      %s53 = int_to_ptr.vmem [resolvable:$true] %s52
      %55 = dma.vmem_to_hbm [thread:$0]  %s53, 64, %s2, [#allocation4]
    $region17: #{tpu_custom_call.1} parent=1 // pred_fallthru
      _
    // Predicated region
    $region18: #{tpu_custom_call.1} parent=1 // pred_check
      _
    $region19: #{tpu_custom_call.1} parent=1 // pred_check_branch
      %57 = sbr.rel (0) target = $region21
    $region20: #{tpu_custom_call.1} parent=1 // pred_region
      %58 = dma.done [#allocation4], 64
    $region21: #{tpu_custom_call.1} parent=1 // pred_fallthru
      _
    %59 = vsyncpa [#allocation3], 1
    %60 = vsyncpa [#allocation4], 1

</llo_original>
